<compile_context>
chip_gen: v6e
topology: v6e:2x2x1
jax: 0.10.0
libtpu: 0.0.40
codegen_flags: <defaults>
</compile_context>

<pallas_src>
import math
from functools import partial

import jax
import jax.numpy as jnp
from jax.experimental import pallas as pl
from jax.experimental.pallas import tpu as pltpu

D_VIT = 768      # hardcoded in the PyTorch module (v_p / g_p input dim)
D_RES = 2560     # hardcoded in the PyTorch module (r_p input dim)
LN_EPS = 1e-5    # nn.LayerNorm default


def _round_up(n, m):
    return ((n + m - 1) // m) * m


def _layernorm(x, gamma, beta):
    # single-pass variance (E[x^2] - mu^2): one fewer cross-lane (XLU) reduction
    mu = jnp.mean(x, axis=-1, keepdims=True)
    ms = jnp.mean(x * x, axis=-1, keepdims=True)
    var = jnp.maximum(ms - mu * mu, 0.0)
    return (x - mu) * jax.lax.rsqrt(var + LN_EPS) * gamma + beta


def _branch(x_bf16, w_ref, p_ref):
    """Linear (bf16 operands, f32 accumulate) + ReLU + LayerNorm (f32).

    p_ref rows: [linear bias, LN gamma, LN beta] (all f32).
    """
    p = p_ref[...]
    h = jnp.dot(x_bf16, w_ref[...], preferred_element_type=jnp.float32) + p[0][None, :]
    h = jnp.maximum(h, 0.0)                              # activation: relu
    return _layernorm(h, p[1][None, :], p[2][None, :])
    # TODO(synk): nn.Dropout is identity here (inference mode), no RNG masking.


# ----------------------------------------------------------------------------
# Kernel 1: generic Linear+ReLU+LayerNorm branch, tiled over token rows.
# Used for v_p at ViT source resolution and for g_p once per batch.
# ----------------------------------------------------------------------------
def _branch_kernel(x_ref, w_ref, p_ref, o_ref):
    o_ref[...] = _branch(x_ref[...], w_ref, p_ref).astype(o_ref.dtype)


def branch_forward(x, w, p, *, tile_target=256):
    n, din = x.shape
    d = w.shape[1]
    tile = min(tile_target, _round_up(n, 8))
    n_pad = _round_up(n, tile)
    if n_pad != n:
        x = jnp.pad(x, ((0, n_pad - n), (0, 0)))
    out = pl.pallas_call(
        _branch_kernel,
        grid=(n_pad // tile,),
        in_specs=[
            pl.BlockSpec((tile, din), lambda i: (i, 0)),
            pl.BlockSpec((din, d), lambda i: (0, 0)),
            pl.BlockSpec((3, d), lambda i: (0, 0)),
        ],
        out_specs=pl.BlockSpec((tile, d), lambda i: (i, 0)),
        out_shape=jax.ShapeDtypeStruct((n_pad, d), jnp.float32),
        compiler_params=pltpu.CompilerParams(dimension_semantics=("parallel",)),
    )(x.astype(jnp.bfloat16), w.astype(jnp.bfloat16), p.astype(jnp.float32))
    return out[:n]


# ----------------------------------------------------------------------------
# Kernel 2: r_p branch + MXU gate + sigmoid + gated mix + mix_p, token-tiled.
# ----------------------------------------------------------------------------
def _mix_kernel(vp_ref, res_ref, gp_ref, wr_ref, pr_ref,
                gwv_ref, gwr_ref, gwg_ref, gb_ref, wm_ref, pm_ref,
                o_ref, *, n_tiles):
    b = pl.program_id(0) // n_tiles                      # batch index of this tile

    v = vp_ref[...]                                      # (tile, D) f32, already v_p
    r = _branch(res_ref[...], wr_ref, pr_ref)            # (tile, D) f32, r_p
    g = gp_ref[pl.ds(b, 1), :]                           # (1, D)   f32, per-batch g_p

    # gate: three small MXU matmuls -> (tile, 3) logits, sigmoid on the EUP
    v16 = v.astype(jnp.bfloat16)
    r16 = r.astype(jnp.bfloat16)
    g16 = g.astype(jnp.bfloat16)
    logits = (jnp.dot(v16, gwv_ref[...], preferred_element_type=jnp.float32)
              + jnp.dot(r16, gwr_ref[...], preferred_element_type=jnp.float32)
              + jnp.dot(g16, gwg_ref[...], preferred_element_type=jnp.float32)
              + gb_ref[...])
    s = jax.nn.sigmoid(logits)                           # (tile, 3) f32

    mix = s[:, 0:1] * v + s[:, 1:2] * r + s[:, 2:3] * g  # gated mixture, f32
    out = _branch(mix.astype(jnp.bfloat16), wm_ref, pm_ref)   # mix_p
    o_ref[...] = out.astype(o_ref.dtype)


def nearest_upsample_tokens(x, lh, lw):
    """'b (h w) d -> b d h w' + F.interpolate(nearest) + back, as an index gather."""
    B, S, d = x.shape
    sh = sw = int(math.isqrt(S))
    x = x.reshape(B, sh, sw, d)
    ri = (jnp.arange(lh) * sh) // lh                     # torch nearest: floor(i*in/out)
    ci = (jnp.arange(lw) * sw) // lw
    x = x[:, ri][:, :, ci]
    return x.reshape(B, lh * lw, d)
    # TODO(synk): this nearest-neighbour gather stays in XLA glue (pure indexing).


def multi_visual_embedding(vit_feats, res_feats, global_feats, params, *,
                           out_dim, tile_m=256):
    B, Sv, _ = vit_feats.shape
    _, Sr, _ = res_feats.shape
    lh = lw = int(math.isqrt(Sr))

    # v_p at source resolution, then upsample the out_dim-wide output (6x fewer bytes)
    v_src = branch_forward(vit_feats.reshape(B * Sv, D_VIT),
                           params["wv"], params["pv"], tile_target=tile_m)
    v_up = nearest_upsample_tokens(v_src.reshape(B, Sv, out_dim), lh, lw)  # (B, Sr, D)

    # g_p once per batch
    g_p = branch_forward(global_feats, params["wg"], params["pg"],
                         tile_target=tile_m)                               # (B, D)

    # token tiling (pad per-batch token axis; tiles never cross batch boundaries)
    tile = min(tile_m, _round_up(Sr, 8))
    Sr_pad = _round_up(Sr, tile)
    n_tiles = Sr_pad // tile
    if Sr_pad != Sr:
        v_up = jnp.pad(v_up, ((0, 0), (0, Sr_pad - Sr), (0, 0)))
        res_feats = jnp.pad(res_feats, ((0, 0), (0, Sr_pad - Sr), (0, 0)))
    v_tok = v_up.reshape(B * Sr_pad, out_dim)                    # f32 (already LN'd)
    res_tok = res_feats.reshape(B * Sr_pad, D_RES).astype(jnp.bfloat16)

    # split/transpose the gate weight so the gate becomes three MXU matmuls
    D = out_dim
    gate_w = params["gate_w"]                                    # (3, 3*D), order [v,r,g]
    gwv = gate_w[:, 0:D].T.astype(jnp.bfloat16)                  # (D, 3)
    gwr = gate_w[:, D:2 * D].T.astype(jnp.bfloat16)
    gwg = gate_w[:, 2 * D:3 * D].T.astype(jnp.bfloat16)
    gate_b = params["gate_b"].reshape(1, 3).astype(jnp.float32)

    def full(shape):
        nd = len(shape)
        return pl.BlockSpec(shape, lambda i, _nd=nd: (0,) * _nd)

    in_specs = [
        pl.BlockSpec((tile, out_dim), lambda i: (i, 0)),         # v_p tokens (f32)
        pl.BlockSpec((tile, D_RES), lambda i: (i, 0)),           # res tokens (bf16)
        full((B, out_dim)),                                      # g_p table (f32)
        full((D_RES, out_dim)), full((3, out_dim)),              # r_p weights
        full((out_dim, 3)), full((out_dim, 3)), full((out_dim, 3)),  # gate W split
        full((1, 3)),                                            # gate bias
        full((out_dim, out_dim)), full((3, out_dim)),            # mix_p weights
    ]
    out_specs = pl.BlockSpec((tile, out_dim), lambda i: (i, 0))

    out = pl.pallas_call(
        partial(_mix_kernel, n_tiles=n_tiles),
        grid=(B * n_tiles,),
        in_specs=in_specs,
        out_specs=out_specs,
        out_shape=jax.ShapeDtypeStruct((B * Sr_pad, out_dim), jnp.float32),
        compiler_params=pltpu.CompilerParams(dimension_semantics=("parallel",)),
    )(v_tok, res_tok, g_p,
      params["wr"].astype(jnp.bfloat16), params["pr"],
      gwv, gwr, gwg, gate_b,
      params["wm"].astype(jnp.bfloat16), params["pm"])

    return out.reshape(B, Sr_pad, out_dim)[:, :Sr]


if __name__ == "__main__":
    key = jax.random.PRNGKey(0)
    B = 2
    sh = 4          # vit feature map 4x4  -> 16 ViT tokens
    lh = 8          # res feature map 8x8  -> 64 region tokens
    out_dim = 128
    Sv, Sr = sh * sh, lh * lh

    ks = jax.random.split(key, 10)
    vit_feats = jax.random.normal(ks[0], (B, Sv, D_VIT), jnp.float32)      # ATT_FEATS
    res_feats = jax.random.normal(ks[1], (B, Sr, D_RES), jnp.float32)      # ATT_FEATS_WO_MASK
    global_feats = jax.random.normal(ks[2], (B, D_VIT), jnp.float32)       # GLOBAL_FEATS

    def branch_params(k, din):
        kw, kb = jax.random.split(k)
        w = jax.random.normal(kw, (din, out_dim), jnp.float32) / jnp.sqrt(float(din))
        p = jnp.stack([
            jax.random.normal(kb, (out_dim,), jnp.float32) * 0.02,  # linear bias
            jnp.ones((out_dim,), jnp.float32),                      # LN gamma
            jnp.zeros((out_dim,), jnp.float32),                     # LN beta
        ])
        return w, p

    wv, pv = branch_params(ks[3], D_VIT)
    wr, pr = branch_params(ks[4], D_RES)
    wg, pg = branch_params(ks[5], D_VIT)
    wm, pm = branch_params(ks[6], out_dim)
    gate_w = jax.random.normal(ks[7], (3, 3 * out_dim), jnp.float32) * 0.02
    gate_b = jnp.zeros((3,), jnp.float32)

    params = dict(wv=wv, pv=pv, wr=wr, pr=pr, wg=wg, pg=pg,
                  wm=wm, pm=pm, gate_w=gate_w, gate_b=gate_b)

    out = multi_visual_embedding(vit_feats, res_feats, global_feats, params,
                                 out_dim=out_dim, tile_m=256)
    jax.block_until_ready(out)
    assert out.shape == (B, Sr, out_dim)

    # pure-JAX reference mirroring the module (bf16 matmul operands, f32 everything else)
    def ref():
        def bdot(a, bm):
            return jnp.dot(a.astype(jnp.bfloat16), bm.astype(jnp.bfloat16),
                           preferred_element_type=jnp.float32)

        def branch(x, w, p):
            h = jnp.maximum(bdot(x, w) + p[0], 0.0)
            mu = h.mean(-1, keepdims=True)
            var = jnp.square(h - mu).mean(-1, keepdims=True)
            return (h - mu) * jax.lax.rsqrt(var + LN_EPS) * p[1] + p[2]

        vit_up = nearest_upsample_tokens(vit_feats, lh, lh).reshape(B * Sr, D_VIT)
        v = branch(vit_up, wv, pv)
        r = branch(res_feats.reshape(B * Sr, D_RES), wr, pr)
        g = branch(global_feats, wg, pg)                                   # (B, D)
        g = jnp.broadcast_to(g[:, None, :], (B, Sr, out_dim)).reshape(B * Sr, out_dim)
        logits = bdot(jnp.concatenate([v, r, g], -1), gate_w.T) + gate_b
        s = jax.nn.sigmoid(logits)                                         # (T, 3)
        mix = s[:, 0:1] * v + s[:, 1:2] * r + s[:, 2:3] * g
        return branch(mix, wm, pm).reshape(B, Sr, out_dim)

    expected = ref()
    assert jnp.allclose(out, expected, atol=1e-2, rtol=1e-2), "mismatch vs reference"
    print("KERNEL_OK")
</pallas_src>

<mosaic_0001>
module attributes {stable_mosaic.version = 11 : i64} {
  func.func @_branch_kernel(%arg0: i32, %arg1: memref<32x768xbf16, #tpu.memory_space<vmem>>, %arg2: memref<768x128xbf16, #tpu.memory_space<vmem>>, %arg3: memref<3x128xf32, #tpu.memory_space<vmem>>, %arg4: memref<32x128xf32, #tpu.memory_space<vmem>>) attributes {dimension_semantics = [#tpu.dimension_semantics<parallel>], iteration_bounds = array<i64: 1>, scalar_prefetch = 0 : i64, scratch_operands = 0 : i64, tpu.core_type = #tpu.core_type<tc>, window_params = [{transform_indices = @transform_0, window_bounds = array<i64: 32, 768>}, {pipeline_mode = #tpu.pipeline_mode<synchronous>, transform_indices = @transform_1, window_bounds = array<i64: 768, 128>}, {pipeline_mode = #tpu.pipeline_mode<synchronous>, transform_indices = @transform_2, window_bounds = array<i64: 3, 128>}, {transform_indices = @transform_3, window_bounds = array<i64: 32, 128>}]} {
    %c0 = arith.constant 0 : index
    %c0_0 = arith.constant 0 : index
    %0 = vector.load %arg1[%c0, %c0_0] : memref<32x768xbf16, #tpu.memory_space<vmem>>, vector<32x768xbf16>
    %c0_1 = arith.constant 0 : index
    %c0_2 = arith.constant 0 : index
    %1 = vector.load %arg3[%c0_1, %c0_2] : memref<3x128xf32, #tpu.memory_space<vmem>>, vector<3x128xf32>
    %c0_3 = arith.constant 0 : index
    %c0_4 = arith.constant 0 : index
    %2 = vector.load %arg2[%c0_3, %c0_4] : memref<768x128xbf16, #tpu.memory_space<vmem>>, vector<768x128xbf16>
    %cst = arith.constant dense<0.000000e+00> : vector<32x128xf32>
    %3 = tpu.matmul %0, %2, %cst {dimension_numbers = #tpu.dot_dimension_numbers<[1], [0], [0], [1], [0, 0, 1, 1], [], []>} : vector<32x768xbf16>, vector<768x128xbf16>, vector<32x128xf32> -> vector<32x128xf32>
    %4 = vector.extract_strided_slice %1 {offsets = [0, 0], sizes = [1, 128], strides = [1, 1]} : vector<3x128xf32> to vector<1x128xf32>
    %5 = vector.shape_cast %4 : vector<1x128xf32> to vector<128xf32>
    %6 = vector.shape_cast %5 : vector<128xf32> to vector<1x128xf32>
    %7 = vector.broadcast %6 : vector<1x128xf32> to vector<32x128xf32>
    %8 = arith.addf %3, %7 : vector<32x128xf32>
    %cst_5 = arith.constant 0.000000e+00 : f32
    %9 = vector.broadcast %cst_5 : f32 to vector<32x128xf32>
    %10 = arith.maximumf %8, %9 : vector<32x128xf32>
    %11 = vector.extract_strided_slice %1 {offsets = [1, 0], sizes = [1, 128], strides = [1, 1]} : vector<3x128xf32> to vector<1x128xf32>
    %12 = vector.shape_cast %11 : vector<1x128xf32> to vector<128xf32>
    %13 = vector.shape_cast %12 : vector<128xf32> to vector<1x128xf32>
    %14 = vector.extract_strided_slice %1 {offsets = [2, 0], sizes = [1, 128], strides = [1, 1]} : vector<3x128xf32> to vector<1x128xf32>
    %15 = vector.shape_cast %14 : vector<1x128xf32> to vector<128xf32>
    %16 = vector.shape_cast %15 : vector<128xf32> to vector<1x128xf32>
    %cst_6 = arith.constant dense<0.000000e+00> : vector<32xf32>
    %17 = vector.multi_reduction <add>, %10, %cst_6 [1] : vector<32x128xf32> to vector<32xf32>
    %18 = vector.shape_cast %17 : vector<32xf32> to vector<32x1xf32>
    %cst_7 = arith.constant 1.280000e+02 : f32
    %19 = vector.broadcast %cst_7 : f32 to vector<32x1xf32>
    %20 = arith.divf %18, %19 : vector<32x1xf32>
    %21 = arith.mulf %10, %10 : vector<32x128xf32>
    %cst_8 = arith.constant dense<0.000000e+00> : vector<32xf32>
    %22 = vector.multi_reduction <add>, %21, %cst_8 [1] : vector<32x128xf32> to vector<32xf32>
    %23 = vector.shape_cast %22 : vector<32xf32> to vector<32x1xf32>
    %cst_9 = arith.constant 1.280000e+02 : f32
    %24 = vector.broadcast %cst_9 : f32 to vector<32x1xf32>
    %25 = arith.divf %23, %24 : vector<32x1xf32>
    %26 = arith.mulf %20, %20 : vector<32x1xf32>
    %27 = arith.subf %25, %26 : vector<32x1xf32>
    %cst_10 = arith.constant 0.000000e+00 : f32
    %28 = vector.broadcast %cst_10 : f32 to vector<32x1xf32>
    %29 = arith.maximumf %27, %28 : vector<32x1xf32>
    %30 = vector.broadcast %20 : vector<32x1xf32> to vector<32x128xf32>
    %31 = arith.subf %10, %30 : vector<32x128xf32>
    %cst_11 = arith.constant 9.99999974E-6 : f32
    %32 = vector.broadcast %cst_11 : f32 to vector<32x1xf32>
    %33 = arith.addf %29, %32 : vector<32x1xf32>
    %34 = math.rsqrt %33 : vector<32x1xf32>
    %35 = vector.broadcast %34 : vector<32x1xf32> to vector<32x128xf32>
    %36 = arith.mulf %31, %35 : vector<32x128xf32>
    %37 = vector.broadcast %13 : vector<1x128xf32> to vector<32x128xf32>
    %38 = arith.mulf %36, %37 : vector<32x128xf32>
    %39 = vector.broadcast %16 : vector<1x128xf32> to vector<32x128xf32>
    %40 = arith.addf %38, %39 : vector<32x128xf32>
    %c0_12 = arith.constant 0 : index
    %c0_13 = arith.constant 0 : index
    %41 = vector.load %arg4[%c0_12, %c0_13] : memref<32x128xf32, #tpu.memory_space<vmem>>, vector<32x128xf32>
    tpu.vector_store %arg4[%c0_12, %c0_13], %40 {strides = array<i32>} : memref<32x128xf32, #tpu.memory_space<vmem>>, vector<32x128xf32>,
    return
  }
  func.func @transform_0(%arg0: i32) -> (i32, i32) {
    %c0_i32 = arith.constant 0 : i32
    %c0_i32_0 = arith.constant 0 : i32
    return %arg0, %c0_i32 : i32, i32
  }
  func.func @transform_1(%arg0: i32) -> (i32, i32) {
    %c0_i32 = arith.constant 0 : i32
    %c0_i32_0 = arith.constant 0 : i32
    %c0_i32_1 = arith.constant 0 : i32
    return %c0_i32, %c0_i32_0 : i32, i32
  }
  func.func @transform_2(%arg0: i32) -> (i32, i32) {
    %c0_i32 = arith.constant 0 : i32
    %c0_i32_0 = arith.constant 0 : i32
    %c0_i32_1 = arith.constant 0 : i32
    return %c0_i32, %c0_i32_0 : i32, i32
  }
  func.func @transform_3(%arg0: i32) -> (i32, i32) {
    %c0_i32 = arith.constant 0 : i32
    %c0_i32_0 = arith.constant 0 : i32
    return %arg0, %c0_i32 : i32, i32
  }
}

</mosaic_0001>

<llo_original>
// kernel: tpu_custom_call.1
$region0: #{tpu_custom_call.1}
  #allocation0 [shape = 'u32[]', space=smem, size = 0x4, offset = 0x4, fixed_abs, tag = 'smem constant byte address 0x4 - core index']
  #allocation1 [shape = 'u32[144,128]{1,0:T(1,128)}', space=vmem, size = 0x12000, scoped, tag = 'internal scratch']
  %s0 = inlined_call_operand.hbm [shape: bf16[32,768], index: 0, kind: input, shape index: {}]
  %s1 = inlined_call_operand.hbm [shape: bf16[768,128], index: 1, kind: input, shape index: {}]
  %s2 = inlined_call_operand.hbm [shape: f32[3,128], index: 2, kind: input, shape index: {}]
  %s3 = inlined_call_operand.hbm [shape: f32[32,128], index: 3, kind: output, shape index: {}]
  %s4 = sld [smem:[#allocation0]]
  $region34: #{tpu_custom_call.1} parent=0
    _
  %s6 = ssub.s32 1, %s4
  %s7 = scalar_select 0, %s6, %s4
  $region1: #{tpu_custom_call.1} parent=0
    #allocation2 [shape = 'u8[49152]{0}', space=vmem, size = 0xc000, scoped, tag = 'input window, operand 0, single buffered']
    #allocation3 [shape = 's32[1]{0}', space=sflag, size = 0x4, scoped, tag = 'scoped memory for tpu_custom_call.1']
    #allocation4 [shape = 's32[1]{0}', space=sflag, size = 0x4, scoped, tag = 'scoped memory for tpu_custom_call.1']
    #allocation5 [shape = 'u8[196608]{0}', space=vmem, size = 0x30000, scoped, tag = 'input window, operand 1, single buffered']
    #allocation6 [shape = 's32[1]{0}', space=sflag, size = 0x4, scoped, tag = 'scoped memory for tpu_custom_call.1']
    #allocation7 [shape = 'u8[2048]{0}', space=vmem, size = 0x800, scoped, tag = 'input window, operand 2, single buffered']
    #allocation8 [shape = 'u8[16384]{0}', space=vmem, size = 0x4000, scoped, tag = 'output window, operand 0, single buffered']
    %8 = vsyncpa [#allocation3], 0
    %9 = vsyncpa [#allocation6], 0
    %10 = vsyncpa [#allocation4], 0
    // Predicated region
    $region2: #{tpu_custom_call.1} parent=1 // pred_check
      _
    $region3: #{tpu_custom_call.1} parent=1 // pred_check_branch
      %12 = sbr.rel (0) target = $region5
    $region4: #{tpu_custom_call.1} parent=1 // pred_region
      %s14 = ssub.s32 1536, 1536
      %15 = vsyncadd [#allocation3], %s14
      %s16 = sshll.u32 [#allocation2], 4
      %s17 = int_to_ptr.vmem [resolvable:$true] %s16
      %22 = dma.hbm_to_vmem [thread:$0]  %s0, 1536, %s17, [#allocation3], 384, 384, 24
    $region5: #{tpu_custom_call.1} parent=1 // pred_fallthru
      _
    // Predicated region
    $region6: #{tpu_custom_call.1} parent=1 // pred_check
      _
    $region7: #{tpu_custom_call.1} parent=1 // pred_check_branch
      %24 = sbr.rel (0) target = $region9
    $region8: #{tpu_custom_call.1} parent=1 // pred_region
      %s26 = ssub.s32 6144, 6144
      %27 = vsyncadd [#allocation6], %s26
      %s28 = sshll.u32 [#allocation5], 4
      %s29 = int_to_ptr.vmem [resolvable:$true] %s28
      %34 = dma.hbm_to_vmem [thread:$0]  %s1, 6144, %s29, [#allocation6], 64, 64, 4
    $region9: #{tpu_custom_call.1} parent=1 // pred_fallthru
      _
    // Predicated region
    $region10: #{tpu_custom_call.1} parent=1 // pred_check
      _
    $region11: #{tpu_custom_call.1} parent=1 // pred_check_branch
      %36 = sbr.rel (0) target = $region13
    $region12: #{tpu_custom_call.1} parent=1 // pred_region
      %s38 = ssub.s32 64, 64
      %39 = vsyncadd [#allocation6], %s38
      %s41 = sshll.u32 [#allocation7], 4
      %s42 = int_to_ptr.vmem [resolvable:$true] %s41
      %44 = dma.hbm_to_vmem [thread:$0]  %s2, 64, %s42, [#allocation6]
    $region13: #{tpu_custom_call.1} parent=1 // pred_fallthru
      _
    // Predicated region
    $region14: #{tpu_custom_call.1} parent=1 // pred_check
      _
    $region15: #{tpu_custom_call.1} parent=1 // pred_check_branch
      %46 = sbr.rel (0) target = $region17
    $region16: #{tpu_custom_call.1} parent=1 // pred_region
      %47 = dma.done [#allocation3], 1536
    $region17: #{tpu_custom_call.1} parent=1 // pred_fallthru
      _
    // Predicated region
    $region18: #{tpu_custom_call.1} parent=1 // pred_check
      _
    $region19: #{tpu_custom_call.1} parent=1 // pred_check_branch
      %49 = sbr.rel (0) target = $region21
    $region20: #{tpu_custom_call.1} parent=1 // pred_region
      %50 = dma.done [#allocation6], 6144
    $region21: #{tpu_custom_call.1} parent=1 // pred_fallthru
      _
    // Predicated region
    $region22: #{tpu_custom_call.1} parent=1 // pred_check
      _
    $region23: #{tpu_custom_call.1} parent=1 // pred_check_branch
      %52 = sbr.rel (0) target = $region25
    $region24: #{tpu_custom_call.1} parent=1 // pred_region
      %53 = dma.done [#allocation6], 64
    $region25: #{tpu_custom_call.1} parent=1 // pred_fallthru
      _
    %v55 = vld [vmem:[#allocation2] sm:$0xff]
    %v56 = vld [vmem:[#allocation2 + $0x8] sm:$0xff]
    %v57 = vld [vmem:[#allocation2 + $0x10] sm:$0xff]
    %v58 = vld [vmem:[#allocation2 + $0x18] sm:$0xff]
    %v59 = vld [vmem:[#allocation2 + $0x20] sm:$0xff]
    %v60 = vld [vmem:[#allocation2 + $0x28] sm:$0xff]
    %v61 = vld [vmem:[#allocation2 + $0x30] sm:$0xff]
    %v62 = vld [vmem:[#allocation2 + $0x38] sm:$0xff]
    %v63 = vld [vmem:[#allocation2 + $0x40] sm:$0xff]
    %v64 = vld [vmem:[#allocation2 + $0x48] sm:$0xff]
    %v65 = vld [vmem:[#allocation2 + $0x50] sm:$0xff]
    %v66 = vld [vmem:[#allocation2 + $0x58] sm:$0xff]
    %v67 = vld [vmem:[#allocation7] sm:$0x7]
    %v68 = vld [vmem:[#allocation5] sm:$0xf]
    %v69 = vld [vmem:[#allocation5 + $0x4] sm:$0xf]
    %v70 = vld [vmem:[#allocation5 + $0x8] sm:$0xf]
    %v71 = vld [vmem:[#allocation5 + $0xc] sm:$0xf]
    %v72 = vld [vmem:[#allocation5 + $0x10] sm:$0xf]
    %v73 = vld [vmem:[#allocation5 + $0x14] sm:$0xf]
    %v74 = vld [vmem:[#allocation5 + $0x18] sm:$0xf]
    %v75 = vld [vmem:[#allocation5 + $0x1c] sm:$0xf]
    %v76 = vld [vmem:[#allocation5 + $0x20] sm:$0xf]
    %v77 = vld [vmem:[#allocation5 + $0x24] sm:$0xf]
    %v78 = vld [vmem:[#allocation5 + $0x28] sm:$0xf]
    %v79 = vld [vmem:[#allocation5 + $0x2c] sm:$0xf]
    %v80 = vld [vmem:[#allocation5 + $0x30] sm:$0xf]
    %v81 = vld [vmem:[#allocation5 + $0x34] sm:$0xf]
    %v82 = vld [vmem:[#allocation5 + $0x38] sm:$0xf]
    %v83 = vld [vmem:[#allocation5 + $0x3c] sm:$0xf]
    %v84 = vld [vmem:[#allocation5 + $0x40] sm:$0xf]
    %v85 = vld [vmem:[#allocation5 + $0x44] sm:$0xf]
    %v86 = vld [vmem:[#allocation5 + $0x48] sm:$0xf]
    %v87 = vld [vmem:[#allocation5 + $0x4c] sm:$0xf]
    %v88 = vld [vmem:[#allocation5 + $0x50] sm:$0xf]
    %v89 = vld [vmem:[#allocation5 + $0x54] sm:$0xf]
    %v90 = vld [vmem:[#allocation5 + $0x58] sm:$0xf]
    %v91 = vld [vmem:[#allocation5 + $0x5c] sm:$0xf]
    %v92 = vld [vmem:[#allocation5 + $0x60] sm:$0xf]
    %v93 = vld [vmem:[#allocation5 + $0x64] sm:$0xf]
    %v94 = vld [vmem:[#allocation5 + $0x68] sm:$0xf]
    %v95 = vld [vmem:[#allocation5 + $0x6c] sm:$0xf]
    %v96 = vld [vmem:[#allocation5 + $0x70] sm:$0xf]
    %v97 = vld [vmem:[#allocation5 + $0x74] sm:$0xf]
    %v98 = vld [vmem:[#allocation5 + $0x78] sm:$0xf]
    %v99 = vld [vmem:[#allocation5 + $0x7c] sm:$0xf]
    %v100 = vld [vmem:[#allocation5 + $0x80] sm:$0xf]
    %v101 = vld [vmem:[#allocation5 + $0x84] sm:$0xf]
    %v102 = vld [vmem:[#allocation5 + $0x88] sm:$0xf]
    %v103 = vld [vmem:[#allocation5 + $0x8c] sm:$0xf]
    %v104 = vld [vmem:[#allocation5 + $0x90] sm:$0xf]
    %v105 = vld [vmem:[#allocation5 + $0x94] sm:$0xf]
    %v106 = vld [vmem:[#allocation5 + $0x98] sm:$0xf]
    %v107 = vld [vmem:[#allocation5 + $0x9c] sm:$0xf]
    %v108 = vld [vmem:[#allocation5 + $0xa0] sm:$0xf]
    %v109 = vld [vmem:[#allocation5 + $0xa4] sm:$0xf]
    %v110 = vld [vmem:[#allocation5 + $0xa8] sm:$0xf]
    %v111 = vld [vmem:[#allocation5 + $0xac] sm:$0xf]
    %v112 = vld [vmem:[#allocation5 + $0xb0] sm:$0xf]
    %v113 = vld [vmem:[#allocation5 + $0xb4] sm:$0xf]
    %v114 = vld [vmem:[#allocation5 + $0xb8] sm:$0xf]
    %v115 = vld [vmem:[#allocation5 + $0xbc] sm:$0xf]
    %v116 = vld [vmem:[#allocation5 + $0xc0] sm:$0xf]
    %v117 = vld [vmem:[#allocation5 + $0xc4] sm:$0xf]
    %v118 = vld [vmem:[#allocation5 + $0xc8] sm:$0xf]
    %v119 = vld [vmem:[#allocation5 + $0xcc] sm:$0xf]
    %v120 = vld [vmem:[#allocation5 + $0xd0] sm:$0xf]
    %v121 = vld [vmem:[#allocation5 + $0xd4] sm:$0xf]
    %v122 = vld [vmem:[#allocation5 + $0xd8] sm:$0xf]
    %v123 = vld [vmem:[#allocation5 + $0xdc] sm:$0xf]
    %v124 = vld [vmem:[#allocation5 + $0xe0] sm:$0xf]
    %v125 = vld [vmem:[#allocation5 + $0xe4] sm:$0xf]
    %v126 = vld [vmem:[#allocation5 + $0xe8] sm:$0xf]
    %v127 = vld [vmem:[#allocation5 + $0xec] sm:$0xf]
    %v128 = vld [vmem:[#allocation5 + $0xf0] sm:$0xf]
    %v129 = vld [vmem:[#allocation5 + $0xf4] sm:$0xf]
    %v130 = vld [vmem:[#allocation5 + $0xf8] sm:$0xf]
    %v131 = vld [vmem:[#allocation5 + $0xfc] sm:$0xf]
    %v132 = vld [vmem:[#allocation5 + $0x100] sm:$0xf]
    %v133 = vld [vmem:[#allocation5 + $0x104] sm:$0xf]
    %v134 = vld [vmem:[#allocation5 + $0x108] sm:$0xf]
    %v135 = vld [vmem:[#allocation5 + $0x10c] sm:$0xf]
    %v136 = vld [vmem:[#allocation5 + $0x110] sm:$0xf]
    %v137 = vld [vmem:[#allocation5 + $0x114] sm:$0xf]
    %v138 = vld [vmem:[#allocation5 + $0x118] sm:$0xf]
    %v139 = vld [vmem:[#allocation5 + $0x11c] sm:$0xf]
    %v140 = vld [vmem:[#allocation5 + $0x120] sm:$0xf]
    %v141 = vld [vmem:[#allocation5 + $0x124] sm:$0xf]
    %v142 = vld [vmem:[#allocation5 + $0x128] sm:$0xf]
    %v143 = vld [vmem:[#allocation5 + $0x12c] sm:$0xf]
    %v144 = vld [vmem:[#allocation5 + $0x130] sm:$0xf]
    %v145 = vld [vmem:[#allocation5 + $0x134] sm:$0xf]
    %v146 = vld [vmem:[#allocation5 + $0x138] sm:$0xf]
    %v147 = vld [vmem:[#allocation5 + $0x13c] sm:$0xf]
    %v148 = vld [vmem:[#allocation5 + $0x140] sm:$0xf]
    %v149 = vld [vmem:[#allocation5 + $0x144] sm:$0xf]
    %v150 = vld [vmem:[#allocation5 + $0x148] sm:$0xf]
    %v151 = vld [vmem:[#allocation5 + $0x14c] sm:$0xf]
    %v152 = vld [vmem:[#allocation5 + $0x150] sm:$0xf]
    %v153 = vld [vmem:[#allocation5 + $0x154] sm:$0xf]
    %v154 = vld [vmem:[#allocation5 + $0x158] sm:$0xf]
    %v155 = vld [vmem:[#allocation5 + $0x15c] sm:$0xf]
    %v156 = vld [vmem:[#allocation5 + $0x160] sm:$0xf]
    %v157 = vld [vmem:[#allocation5 + $0x164] sm:$0xf]
    %v158 = vld [vmem:[#allocation5 + $0x168] sm:$0xf]
    %v159 = vld [vmem:[#allocation5 + $0x16c] sm:$0xf]
    %v160 = vld [vmem:[#allocation5 + $0x170] sm:$0xf]
    %v161 = vld [vmem:[#allocation5 + $0x174] sm:$0xf]
    %v162 = vld [vmem:[#allocation5 + $0x178] sm:$0xf]
    %v163 = vld [vmem:[#allocation5 + $0x17c] sm:$0xf]
    %v164 = vlaneseq
    %v165 = vshrl.u32 %v164, 7
    %v166 = vsub.s32 0, %v165
    %v167 = vrot.slane %v67, %v166
    %v180 = vunpack.c.l.b16 %v55
    %v181 = vunpack.c.h.b16 %v55
    %v182 = vunpack.c.l.b16 %v56
    %v183 = vunpack.c.h.b16 %v56
    %v184 = vunpack.c.l.b16 %v57
    %v185 = vunpack.c.h.b16 %v57
    %v186 = vunpack.c.l.b16 %v58
    %v187 = vunpack.c.h.b16 %v58
    %v188 = vunpack.c.l.b16 %v59
    %v189 = vunpack.c.h.b16 %v59
    %v190 = vunpack.c.l.b16 %v60
    %v191 = vunpack.c.h.b16 %v60
    %v192 = vunpack.c.l.b16 %v61
    %v193 = vunpack.c.h.b16 %v61
    %v194 = vunpack.c.l.b16 %v62
    %v195 = vunpack.c.h.b16 %v62
    %v196 = vunpack.c.l.b16 %v63
    %v197 = vunpack.c.h.b16 %v63
    %v198 = vunpack.c.l.b16 %v64
    %v199 = vunpack.c.h.b16 %v64
    %v200 = vunpack.c.l.b16 %v65
    %v201 = vunpack.c.h.b16 %v65
    %v202 = vunpack.c.l.b16 %v66
    %v203 = vunpack.c.h.b16 %v66
    %v204 = vpack.c.b16 %v186, %v180
    %v205 = vpack.c.b16 %v187, %v181
    %v206 = vpack.c.b16 %v188, %v182
    %v207 = vpack.c.b16 %v189, %v183
    %v208 = vpack.c.b16 %v190, %v184
    %v209 = vpack.c.b16 %v191, %v185
    %v210 = vpack.c.b16 %v198, %v192
    %v211 = vpack.c.b16 %v199, %v193
    %v212 = vpack.c.b16 %v200, %v194
    %v213 = vpack.c.b16 %v201, %v195
    %v214 = vpack.c.b16 %v202, %v196
    %v215 = vpack.c.b16 %v203, %v197
    %v324 = vunpack.c.l.b16 %v68
    %v325 = vunpack.c.l.b16 %v69
    %v326 = vunpack.c.l.b16 %v70
    %v327 = vunpack.c.l.b16 %v71
    %v328 = vunpack.c.l.b16 %v72
    %v329 = vunpack.c.l.b16 %v73
    %v330 = vunpack.c.l.b16 %v74
    %v331 = vunpack.c.l.b16 %v75
    %v332 = vunpack.c.l.b16 %v76
    %v333 = vunpack.c.l.b16 %v77
    %v334 = vunpack.c.l.b16 %v78
    %v335 = vunpack.c.l.b16 %v79
    %v336 = vunpack.c.l.b16 %v80
    %v337 = vunpack.c.l.b16 %v81
    %v338 = vunpack.c.l.b16 %v82
    %v339 = vunpack.c.l.b16 %v83
    %v340 = vunpack.c.l.b16 %v84
    %v341 = vunpack.c.l.b16 %v85
    %v342 = vunpack.c.l.b16 %v86
    %v343 = vunpack.c.l.b16 %v87
    %v344 = vunpack.c.l.b16 %v88
    %v345 = vunpack.c.l.b16 %v89
    %v346 = vunpack.c.l.b16 %v90
    %v347 = vunpack.c.l.b16 %v91
    %v348 = vunpack.c.l.b16 %v92
    %v349 = vunpack.c.l.b16 %v93
    %v350 = vunpack.c.l.b16 %v94
    %v351 = vunpack.c.l.b16 %v95
    %v352 = vunpack.c.l.b16 %v96
    %v353 = vunpack.c.l.b16 %v97
    %v354 = vunpack.c.l.b16 %v98
    %v355 = vunpack.c.l.b16 %v99
    %v356 = vunpack.c.l.b16 %v100
    %v357 = vunpack.c.l.b16 %v101
    %v358 = vunpack.c.l.b16 %v102
    %v359 = vunpack.c.l.b16 %v103
    %v360 = vunpack.c.l.b16 %v104
    %v361 = vunpack.c.l.b16 %v105
    %v362 = vunpack.c.l.b16 %v106
    %v363 = vunpack.c.l.b16 %v107
    %v364 = vunpack.c.l.b16 %v108
    %v365 = vunpack.c.l.b16 %v109
    %v366 = vunpack.c.l.b16 %v110
    %v367 = vunpack.c.l.b16 %v111
    %v368 = vunpack.c.l.b16 %v112
    %v369 = vunpack.c.l.b16 %v113
    %v370 = vunpack.c.l.b16 %v114
    %v371 = vunpack.c.l.b16 %v115
    %v372 = vunpack.c.l.b16 %v116
    %v373 = vunpack.c.l.b16 %v117
    %v374 = vunpack.c.l.b16 %v118
    %v375 = vunpack.c.l.b16 %v119
    %v376 = vunpack.c.l.b16 %v120
    %v377 = vunpack.c.l.b16 %v121
    %v378 = vunpack.c.l.b16 %v122
    %v379 = vunpack.c.l.b16 %v123
    %v380 = vunpack.c.l.b16 %v124
    %v381 = vunpack.c.l.b16 %v125
    %v382 = vunpack.c.l.b16 %v126
    %v383 = vunpack.c.l.b16 %v127
    %v384 = vunpack.c.l.b16 %v128
    %v385 = vunpack.c.l.b16 %v129
    %v386 = vunpack.c.l.b16 %v130
    %v387 = vunpack.c.l.b16 %v131
    %v388 = vunpack.c.l.b16 %v132
    %v389 = vunpack.c.l.b16 %v133
    %v390 = vunpack.c.l.b16 %v134
    %v391 = vunpack.c.l.b16 %v135
    %v392 = vunpack.c.l.b16 %v136
    %v393 = vunpack.c.l.b16 %v137
    %v394 = vunpack.c.l.b16 %v138
    %v395 = vunpack.c.l.b16 %v139
    %v396 = vunpack.c.l.b16 %v140
    %v397 = vunpack.c.l.b16 %v141
    %v398 = vunpack.c.l.b16 %v142
    %v399 = vunpack.c.l.b16 %v143
    %v400 = vunpack.c.l.b16 %v144
    %v401 = vunpack.c.l.b16 %v145
    %v402 = vunpack.c.l.b16 %v146
    %v403 = vunpack.c.l.b16 %v147
    %v404 = vunpack.c.l.b16 %v148
    %v405 = vunpack.c.l.b16 %v149
    %v406 = vunpack.c.l.b16 %v150
    %v407 = vunpack.c.l.b16 %v151
    %v408 = vunpack.c.l.b16 %v152
    %v409 = vunpack.c.l.b16 %v153
    %v410 = vunpack.c.l.b16 %v154
    %v411 = vunpack.c.l.b16 %v155
    %v412 = vunpack.c.l.b16 %v156
    %v413 = vunpack.c.l.b16 %v157
    %v414 = vunpack.c.l.b16 %v158
    %v415 = vunpack.c.l.b16 %v159
    %v416 = vunpack.c.l.b16 %v160
    %v417 = vunpack.c.l.b16 %v161
    %v418 = vunpack.c.l.b16 %v162
    %v419 = vunpack.c.l.b16 %v163
    %v420 = vpack.c.b16 %v325, %v324
    %v421 = vpack.c.b16 %v327, %v326
    %v422 = vpack.c.b16 %v329, %v328
    %v423 = vpack.c.b16 %v331, %v330
    %v424 = vpack.c.b16 %v333, %v332
    %v425 = vpack.c.b16 %v335, %v334
    %v426 = vpack.c.b16 %v337, %v336
    %v427 = vpack.c.b16 %v339, %v338
    %v428 = vpack.c.b16 %v341, %v340
    %v429 = vpack.c.b16 %v343, %v342
    %v430 = vpack.c.b16 %v345, %v344
    %v431 = vpack.c.b16 %v347, %v346
    %v432 = vpack.c.b16 %v349, %v348
    %v433 = vpack.c.b16 %v351, %v350
    %v434 = vpack.c.b16 %v353, %v352
    %v435 = vpack.c.b16 %v355, %v354
    %v436 = vpack.c.b16 %v357, %v356
    %v437 = vpack.c.b16 %v359, %v358
    %v438 = vpack.c.b16 %v361, %v360
    %v439 = vpack.c.b16 %v363, %v362
    %v440 = vpack.c.b16 %v365, %v364
    %v441 = vpack.c.b16 %v367, %v366
    %v442 = vpack.c.b16 %v369, %v368
    %v443 = vpack.c.b16 %v371, %v370
    %v444 = vpack.c.b16 %v373, %v372
    %v445 = vpack.c.b16 %v375, %v374
    %v446 = vpack.c.b16 %v377, %v376
    %v447 = vpack.c.b16 %v379, %v378
    %v448 = vpack.c.b16 %v381, %v380
    %v449 = vpack.c.b16 %v383, %v382
    %v450 = vpack.c.b16 %v385, %v384
    %v451 = vpack.c.b16 %v387, %v386
    %v452 = vpack.c.b16 %v389, %v388
    %v453 = vpack.c.b16 %v391, %v390
    %v454 = vpack.c.b16 %v393, %v392
    %v455 = vpack.c.b16 %v395, %v394
    %v456 = vpack.c.b16 %v397, %v396
    %v457 = vpack.c.b16 %v399, %v398
    %v458 = vpack.c.b16 %v401, %v400
    %v459 = vpack.c.b16 %v403, %v402
    %v460 = vpack.c.b16 %v405, %v404
    %v461 = vpack.c.b16 %v407, %v406
    %v462 = vpack.c.b16 %v409, %v408
    %v463 = vpack.c.b16 %v411, %v410
    %v464 = vpack.c.b16 %v413, %v412
    %v465 = vpack.c.b16 %v415, %v414
    %v466 = vpack.c.b16 %v417, %v416
    %v467 = vpack.c.b16 %v419, %v418
    %516 = vmatprep.subr.bf16.mxu0 0
    %517 = vmatpush1.bf16.msra.mxu0 %v427
    %518 = vmatprep.subr.bf16.mxu0 0
    %519 = vmatpush1.bf16.msra.mxu0 %v426
    %520 = vmatprep.subr.bf16.mxu0 0
    %521 = vmatpush1.bf16.msra.mxu0 %v425
    %522 = vmatprep.subr.bf16.mxu0 0
    %523 = vmatpush1.bf16.msra.mxu0 %v424
    %524 = vmatprep.subr.bf16.mxu0 0
    %525 = vmatpush1.bf16.msra.mxu0 %v423
    %526 = vmatprep.subr.bf16.mxu0 0
    %527 = vmatpush1.bf16.msra.mxu0 %v422
    %528 = vmatprep.subr.bf16.mxu0 0
    %529 = vmatpush1.bf16.msra.mxu0 %v421
    %530 = vmatprep.subr.bf16.mxu0 0
    %531 = vmatpush1.bf16.msra.mxu0 %v420
    %532 = vmatprep.subr.bf16.mxu0 0
    %533 = vmatpush2.bf16.msra.mxu0 %v435
    %534 = vmatprep.subr.bf16.mxu0 0
    %535 = vmatpush2.bf16.msra.mxu0 %v434
    %536 = vmatprep.subr.bf16.mxu0 0
    %537 = vmatpush2.bf16.msra.mxu0 %v433
    %538 = vmatprep.subr.bf16.mxu0 0
    %539 = vmatpush2.bf16.msra.mxu0 %v432
    %540 = vmatprep.subr.bf16.mxu0 0
    %541 = vmatpush2.bf16.msra.mxu0 %v431
    %542 = vmatprep.subr.bf16.mxu0 0
    %543 = vmatpush2.bf16.msra.mxu0 %v430
    %544 = vmatprep.subr.bf16.mxu0 0
    %545 = vmatpush2.bf16.msra.mxu0 %v429
    %546 = vmatprep.subr.bf16.mxu0 0
    %547 = vmatpush2.bf16.msra.mxu0 %v428
    %548 = vmatprep.mubr.bf16.mxu0 %v205
    %549 = vmatmul.mubr.bf16.gmra.mxu0 %v204
    %v550 = vpop.f32.mrf.mxu0
    %v551 = vadd.f32 %v167, %v550
    %v552 = vpop.f32.mrf.mxu0
    %v553 = vpop.f32.mrf.mxu0
    %v554 = vadd.f32 %v167, %v553
    %v555 = vpop.f32.mrf.mxu0
    %556 = vmatprep.mubr.bf16.mxu0 %v211
    %557 = vmatmul.mubr.bf16.gmra.mxu0 %v210
    %v558 = vpop.f32.mrf.mxu0
    %v559 = vadd.f32 %v167, %v558
    %v560 = vpop.f32.mrf.mxu0
    %v561 = vpop.f32.mrf.mxu0
    %v562 = vadd.f32 %v167, %v561
    %v563 = vpop.f32.mrf.mxu0
    %564 = vdwg.mxu0
    %565 = vmatprep.subr.bf16.mxu0 0
    %566 = vmatpush1.bf16.msra.mxu0 %v443
    %567 = vmatprep.subr.bf16.mxu0 0
    %568 = vmatpush1.bf16.msra.mxu0 %v442
    %569 = vmatprep.subr.bf16.mxu0 0
    %570 = vmatpush1.bf16.msra.mxu0 %v441
    %571 = vmatprep.subr.bf16.mxu0 0
    %572 = vmatpush1.bf16.msra.mxu0 %v440
    %573 = vmatprep.subr.bf16.mxu0 0
    %574 = vmatpush1.bf16.msra.mxu0 %v439
    %575 = vmatprep.subr.bf16.mxu0 0
    %576 = vmatpush1.bf16.msra.mxu0 %v438
    %577 = vmatprep.subr.bf16.mxu0 0
    %578 = vmatpush1.bf16.msra.mxu0 %v437
    %579 = vmatprep.subr.bf16.mxu0 0
    %580 = vmatpush1.bf16.msra.mxu0 %v436
    %581 = vmatprep.subr.bf16.mxu0 0
    %582 = vmatpush2.bf16.msra.mxu0 %v451
    %583 = vmatprep.subr.bf16.mxu0 0
    %584 = vmatpush2.bf16.msra.mxu0 %v450
    %585 = vmatprep.subr.bf16.mxu0 0
    %586 = vmatpush2.bf16.msra.mxu0 %v449
    %587 = vmatprep.subr.bf16.mxu0 0
    %588 = vmatpush2.bf16.msra.mxu0 %v448
    %589 = vmatprep.subr.bf16.mxu0 0
    %590 = vmatpush2.bf16.msra.mxu0 %v447
    %591 = vmatprep.subr.bf16.mxu0 0
    %592 = vmatpush2.bf16.msra.mxu0 %v446
    %593 = vmatprep.subr.bf16.mxu0 0
    %594 = vmatpush2.bf16.msra.mxu0 %v445
    %595 = vmatprep.subr.bf16.mxu0 0
    %596 = vmatpush2.bf16.msra.mxu0 %v444
    %597 = vmatprep.mubr.bf16.mxu0 %v207
    %598 = vmatmul.mubr.bf16.gmra.mxu0 %v206
    %v599 = vpop.f32.mrf.mxu0
    %v600 = vadd.f32 %v551, %v599
    %v601 = vpop.f32.mrf.mxu0
    %v602 = vpop.f32.mrf.mxu0
    %v603 = vadd.f32 %v554, %v602
    %v604 = vpop.f32.mrf.mxu0
    %605 = vmatprep.mubr.bf16.mxu0 %v213
    %606 = vmatmul.mubr.bf16.gmra.mxu0 %v212
    %v607 = vpop.f32.mrf.mxu0
    %v608 = vadd.f32 %v559, %v607
    %v609 = vpop.f32.mrf.mxu0
    %v610 = vpop.f32.mrf.mxu0
    %v611 = vadd.f32 %v562, %v610
    %v612 = vpop.f32.mrf.mxu0
    %613 = vdwg.mxu0
    %614 = vmatprep.subr.bf16.mxu0 0
    %615 = vmatpush1.bf16.msra.mxu0 %v459
    %616 = vmatprep.subr.bf16.mxu0 0
    %617 = vmatpush1.bf16.msra.mxu0 %v458
    %618 = vmatprep.subr.bf16.mxu0 0
    %619 = vmatpush1.bf16.msra.mxu0 %v457
    %620 = vmatprep.subr.bf16.mxu0 0
    %621 = vmatpush1.bf16.msra.mxu0 %v456
    %622 = vmatprep.subr.bf16.mxu0 0
    %623 = vmatpush1.bf16.msra.mxu0 %v455
    %624 = vmatprep.subr.bf16.mxu0 0
    %625 = vmatpush1.bf16.msra.mxu0 %v454
    %626 = vmatprep.subr.bf16.mxu0 0
    %627 = vmatpush1.bf16.msra.mxu0 %v453
    %628 = vmatprep.subr.bf16.mxu0 0
    %629 = vmatpush1.bf16.msra.mxu0 %v452
    %630 = vmatprep.subr.bf16.mxu0 0
    %631 = vmatpush2.bf16.msra.mxu0 %v467
    %632 = vmatprep.subr.bf16.mxu0 0
    %633 = vmatpush2.bf16.msra.mxu0 %v466
    %634 = vmatprep.subr.bf16.mxu0 0
    %635 = vmatpush2.bf16.msra.mxu0 %v465
    %636 = vmatprep.subr.bf16.mxu0 0
    %637 = vmatpush2.bf16.msra.mxu0 %v464
    %638 = vmatprep.subr.bf16.mxu0 0
    %639 = vmatpush2.bf16.msra.mxu0 %v463
    %640 = vmatprep.subr.bf16.mxu0 0
    %641 = vmatpush2.bf16.msra.mxu0 %v462
    %642 = vmatprep.subr.bf16.mxu0 0
    %643 = vmatpush2.bf16.msra.mxu0 %v461
    %644 = vmatprep.subr.bf16.mxu0 0
    %645 = vmatpush2.bf16.msra.mxu0 %v460
    %646 = vmatprep.mubr.bf16.mxu0 %v209
    %647 = vmatmul.mubr.bf16.gmra.mxu0 %v208
    %v648 = vpop.f32.mrf.mxu0
    %v649 = vadd.f32 %v600, %v648
    %v650 = vpop.f32.mrf.mxu0
    %v651 = vpop.f32.mrf.mxu0
    %v652 = vadd.f32 %v603, %v651
    %v653 = vpop.f32.mrf.mxu0
    %654 = vmatprep.mubr.bf16.mxu0 %v215
    %655 = vmatmul.mubr.bf16.gmra.mxu0 %v214
    %v656 = vpop.f32.mrf.mxu0
    %v657 = vadd.f32 %v608, %v656
    %v658 = vpop.f32.mrf.mxu0
    %v659 = vpop.f32.mrf.mxu0
    %v660 = vadd.f32 %v611, %v659
    %v661 = vpop.f32.mrf.mxu0
    %662 = vdwg.mxu0
    %v663 = vmax.f32 %v649, 0.0
    %v664 = vmax.f32 %v652, 0.0
    %v665 = vmax.f32 %v657, 0.0
    %v666 = vmax.f32 %v660, 0.0
    %667 = vadd.xlane.f32.xlu0 %v663
    %v668 = vpop.xlane.xlu0 %667
    %669 = vadd.xlane.f32.xlu0 %v664
    %v670 = vpop.xlane.xlu0 %669
    %671 = vadd.xlane.f32.xlu0 %v665
    %v672 = vpop.xlane.xlu0 %671
    %673 = vadd.xlane.f32.xlu0 %v666
    %v674 = vpop.xlane.xlu0 %673
    %v675 = vrcp.pop 128.0
    %v676 = vmul.f32 %v668, %v675
    %v677 = vmul.f32 %v670, %v675
    %v678 = vmul.f32 %v672, %v675
    %v679 = vmul.f32 %v674, %v675
    %v680 = vmul.f32 %v663, %v663
    %v681 = vmul.f32 %v664, %v664
    %v682 = vmul.f32 %v665, %v665
    %v683 = vmul.f32 %v666, %v666
    %684 = vadd.xlane.f32.xlu0 %v680
    %v685 = vpop.xlane.xlu0 %684
    %686 = vadd.xlane.f32.xlu0 %v681
    %v687 = vpop.xlane.xlu0 %686
    %688 = vadd.xlane.f32.xlu0 %v682
    %v689 = vpop.xlane.xlu0 %688
    %690 = vadd.xlane.f32.xlu0 %v683
    %v691 = vpop.xlane.xlu0 %690
    %v692 = vmul.f32 %v685, %v675
    %v693 = vmul.f32 %v687, %v675
    %v694 = vmul.f32 %v689, %v675
    %v695 = vmul.f32 %v691, %v675
    %v696 = vmul.f32 %v676, %v676
    %v697 = vmul.f32 %v677, %v677
    %v698 = vmul.f32 %v678, %v678
    %v699 = vmul.f32 %v679, %v679
    %v700 = vsub.f32 %v692, %v696
    %v701 = vsub.f32 %v693, %v697
    %v702 = vsub.f32 %v694, %v698
    %v703 = vsub.f32 %v695, %v699
    %v704 = vmax.f32 %v700, 0.0
    %v705 = vmax.f32 %v701, 0.0
    %v706 = vmax.f32 %v702, 0.0
    %v707 = vmax.f32 %v703, 0.0
    %v708 = vsub.f32 %v663, %v676
    %v709 = vsub.f32 %v664, %v677
    %v710 = vsub.f32 %v665, %v678
    %v711 = vsub.f32 %v666, %v679
    %v712 = vadd.f32 %v704, 1e-05
    %v713 = vadd.f32 %v705, 1e-05
    %v714 = vadd.f32 %v706, 1e-05
    %v715 = vadd.f32 %v707, 1e-05
    %v716 = vrsqrt.pop %v712
    %v717 = vrsqrt.pop %v713
    %v718 = vrsqrt.pop %v714
    %v719 = vrsqrt.pop %v715
    %v720 = vmul.f32 %v708, %v716
    %v721 = vmul.f32 %v709, %v717
    %v722 = vmul.f32 %v710, %v718
    %v723 = vmul.f32 %v711, %v719
    %v724 = vlaneseq
    %v725 = vshrl.u32 %v724, 7
    %v726 = vsub.s32 1, %v725
    %v727 = vrot.slane %v67, %v726
    %v728 = vmul.f32 %v720, %v727
    %v729 = vmul.f32 %v721, %v727
    %v730 = vmul.f32 %v722, %v727
    %v731 = vmul.f32 %v723, %v727
    %v732 = vlaneseq
    %v733 = vshrl.u32 %v732, 7
    %v734 = vsub.s32 2, %v733
    %v735 = vrot.slane %v67, %v734
    %v736 = vadd.f32 %v728, %v735
    %v737 = vadd.f32 %v729, %v735
    %v738 = vadd.f32 %v730, %v735
    %v739 = vadd.f32 %v731, %v735
    %740 = vst [vmem:[#allocation8] sm:$0xff] %v736
    %741 = vst [vmem:[#allocation8 + $0x8] sm:$0xff] %v737
    %742 = vst [vmem:[#allocation8 + $0x10] sm:$0xff] %v738
    %743 = vst [vmem:[#allocation8 + $0x18] sm:$0xff] %v739
    // Predicated region
    $region26: #{tpu_custom_call.1} parent=1 // pred_check
      _
    $region27: #{tpu_custom_call.1} parent=1 // pred_check_branch
      %745 = sbr.rel (0) target = $region29
    $region28: #{tpu_custom_call.1} parent=1 // pred_region
      %s747 = ssub.s32 512, 512
      %748 = vsyncadd [#allocation4], %s747
      %s749 = sshll.u32 [#allocation8], 4
      %s750 = int_to_ptr.vmem [resolvable:$true] %s749
      %755 = dma.vmem_to_hbm [thread:$0]  %s750, 512, %s3, [#allocation4], 128, 128, 8
    $region29: #{tpu_custom_call.1} parent=1 // pred_fallthru
      _
    // Predicated region
    $region30: #{tpu_custom_call.1} parent=1 // pred_check
      _
    $region31: #{tpu_custom_call.1} parent=1 // pred_check_branch
      %757 = sbr.rel (0) target = $region33
    $region32: #{tpu_custom_call.1} parent=1 // pred_region
      %758 = dma.done [#allocation4], 512
    $region33: #{tpu_custom_call.1} parent=1 // pred_fallthru
      _
    %759 = vsyncpa [#allocation3], 1
    %760 = vsyncpa [#allocation6], 1
    %761 = vsyncpa [#allocation4], 1

</llo_original>
